<compile_context>
chip_gen: v6e
topology: v6e:2x2x1
jax: 0.10.0
libtpu: 0.0.40
codegen_flags: <defaults>
</compile_context>

<pallas_src>
import jax
import jax.numpy as jnp
from jax import lax
from jax.experimental import pallas as pl
from jax.experimental.pallas import tpu as pltpu

# ---- static problem sizes (small example) ----
B = 2        # batch
S = 16       # sequence length
D = 32       # input_dim (hidden)
N = 8        # spans per batch element
NW = 10      # num_width_embeddings
W = 16       # span_width_embedding_dim

BN = B * N               # total spans                      (16)
BS = B * S               # flattened sequence length        (32)
NW_PAD = 16              # width table rows padded to sublane multiple
OUT_DIM = 3 * D + W      # "x,y,x*y" -> 3*D, + width emb    (112)
OUT_PAD = 128            # lane-dense padded output width
K_PAD = 128              # padded contraction dim (2*BS + NW_PAD = 80 -> 128)


def _span_kernel(idx_ref, seq_ref, wtab_ref, out_ref, rhs_ref):
    """Single gridless invocation over the whole (flattened) batch.

    idx_ref  : VMEM (BN, 3) int32  — [shifted_start, BS+shifted_end, 2*BS+width]
    seq_ref  : VMEM (BS, D) f32    — flattened sequence tensor
    wtab_ref : VMEM (NW_PAD, W) f32 — zero-padded width-embedding table
    out_ref  : VMEM (BN, OUT_PAD) f32 — [x | y | x*y | width_emb | 0-pad]
    rhs_ref  : VMEM (K_PAD, OUT_PAD) f32 scratch — block-diagonal gather RHS
    """
    # --- Build the block-diagonal RHS in VMEM scratch ---
    #   rows [0, BS)            lanes [0,   D)      <- seq   (start block -> x lanes)
    #   rows [BS, 2*BS)         lanes [D, 2*D)      <- seq   (end block   -> y lanes)
    #   rows [2*BS, 2*BS+NW_PAD) lanes [3*D, 3*D+W) <- wtab  (width block -> emb lanes)
    rhs_ref[...] = jnp.zeros_like(rhs_ref)
    seq = seq_ref[...]
    rhs_ref[0:BS, 0:D] = seq
    rhs_ref[BS:2 * BS, D:2 * D] = seq
    rhs_ref[2 * BS:2 * BS + NW_PAD, 3 * D:3 * D + W] = wtab_ref[...]

    # --- LHS: one-hot rows with three ones (start / BS+end / 2*BS+width) ---
    idx = idx_ref[...]                                          # (BN, 3)
    iota = lax.broadcasted_iota(jnp.int32, (BN, K_PAD), 1)
    lhs = ((iota == idx[:, 0:1])
           | (iota == idx[:, 1:2])
           | (iota == idx[:, 2:3])).astype(jnp.float32)         # (BN, K_PAD)

    # --- One MXU pass -> lane-dense [x | y | 0 | w_emb | pad] ---
    # Precision pinned so the exact-0/1 gather does not round seq through bf16.
    res = jnp.dot(lhs, rhs_ref[...],
                  preferred_element_type=jnp.float32,
                  precision=lax.Precision.HIGHEST)              # (BN, OUT_PAD)

    # Unmasked 128-lane store, then fill lanes [2*D, 3*D) with x*y on the VPU.
    out_ref[...] = res
    out_ref[:, 2 * D:3 * D] = res[:, 0:D] * res[:, D:2 * D]


@jax.jit
def endpoint_span_extractor_padded(sequence_tensor, span_indices,
                                   width_embedding_table):
    """Returns the lane-dense (B, N, 128) slab [x|y|x*y|w_emb|0-pad]."""
    b, s, d = sequence_tensor.shape
    n = span_indices.shape[1]
    assert (b, s, d, n) == (B, S, D, N)
    assert width_embedding_table.shape == (NW, W)

    starts = span_indices[..., 0].astype(jnp.int32)             # (B, N)
    ends = span_indices[..., 1].astype(jnp.int32)               # (B, N)

    # flatten_and_batch_shift_indices: index into the (B*S, D) flattened seq.
    offsets = (jnp.arange(B, dtype=jnp.int32) * S)[:, None]     # (B, 1)
    g_starts = (starts + offsets).reshape(BN)                   # (BN,)
    g_ends = (ends + offsets).reshape(BN)                       # (BN,)
    widths = (ends - starts).reshape(BN)                        # (BN,)

    # Single packed index block: [start_col, end_col, width_col] per span.
    idx = jnp.stack([g_starts, BS + g_ends, 2 * BS + widths],
                    axis=-1).astype(jnp.int32)                  # (BN, 3)

    seq_flat = sequence_tensor.reshape(BS, D)                   # (BS, D)
    wtab_pad = jnp.zeros((NW_PAD, W), jnp.float32).at[:NW].set(
        width_embedding_table.astype(jnp.float32))              # (NW_PAD, W)

    out_padded = pl.pallas_call(
        _span_kernel,
        out_shape=jax.ShapeDtypeStruct((BN, OUT_PAD), jnp.float32),
        in_specs=[
            pl.BlockSpec(memory_space=pltpu.MemorySpace.VMEM),  # idx
            pl.BlockSpec(memory_space=pltpu.MemorySpace.VMEM),  # seq_flat
            pl.BlockSpec(memory_space=pltpu.MemorySpace.VMEM),  # width table
        ],
        out_specs=pl.BlockSpec(memory_space=pltpu.MemorySpace.VMEM),
        scratch_shapes=[pltpu.VMEM((K_PAD, OUT_PAD), jnp.float32)],
    )(idx, seq_flat, wtab_pad)

    return out_padded.reshape(B, N, OUT_PAD)


@jax.jit
def endpoint_span_extractor(sequence_tensor, span_indices, width_embedding_table):
    """Module-faithful forward: (B, N, 3*D + W) = [x ; y ; x*y ; width_emb].

    Downstream consumers that can read the 128-lane padded layout should use
    endpoint_span_extractor_padded directly and skip this slice.
    """
    padded = endpoint_span_extractor_padded(
        sequence_tensor, span_indices, width_embedding_table)
    return padded[..., :OUT_DIM]


def _reference(sequence_tensor, span_indices, width_embedding_table):
    """Pure-JAX reference mirroring the PyTorch forward (masks = None)."""
    starts = span_indices[..., 0]
    ends = span_indices[..., 1]
    x = jnp.take_along_axis(sequence_tensor, starts[..., None], axis=1)
    y = jnp.take_along_axis(sequence_tensor, ends[..., None], axis=1)
    widths = ends - starts
    w_emb = width_embedding_table[widths]
    return jnp.concatenate([x, y, x * y, w_emb], axis=-1)


if __name__ == "__main__":
    key = jax.random.PRNGKey(0)
    k_seq, k_start, k_width, k_emb = jax.random.split(key, 4)

    sequence_tensor = jax.random.normal(k_seq, (B, S, D), dtype=jnp.float32)

    # spans with 0 <= start <= end < S and width < NW (valid embedding indices)
    starts = jax.random.randint(k_start, (B, N), 0, S)
    widths = jax.random.randint(k_width, (B, N), 0, NW)
    ends = jnp.minimum(starts + widths, S - 1)
    span_indices = jnp.stack([starts, ends], axis=-1).astype(jnp.int32)  # (B, N, 2)

    # deterministic "nn.Embedding" weights
    width_embedding_table = jax.random.normal(k_emb, (NW, W), dtype=jnp.float32)

    out = endpoint_span_extractor(sequence_tensor, span_indices,
                                  width_embedding_table)
    out = jax.block_until_ready(out)

    ref = _reference(sequence_tensor, span_indices, width_embedding_table)
    assert out.shape == (B, N, OUT_DIM)
    assert jnp.allclose(out, ref, atol=1e-5, rtol=1e-5)

    print("KERNEL_OK")
</pallas_src>

<mosaic_0001>
module attributes {stable_mosaic.version = 11 : i64} {
  func.func @_span_kernel(%arg0: memref<16x3xi32, #tpu.memory_space<vmem>>, %arg1: memref<32x32xf32, #tpu.memory_space<vmem>>, %arg2: memref<16x16xf32, #tpu.memory_space<vmem>>, %arg3: memref<16x128xf32, #tpu.memory_space<vmem>>, %arg4: memref<128x128xf32, #tpu.memory_space<vmem>>) attributes {dimension_semantics = [], scalar_prefetch = 0 : i64, scratch_operands = 1 : i64, tpu.core_type = #tpu.core_type<tc>} {
    %cst = arith.constant 0.000000e+00 : f32
    %0 = vector.broadcast %cst : f32 to vector<128x128xf32>
    %c0 = arith.constant 0 : index
    %c0_0 = arith.constant 0 : index
    %1 = vector.load %arg4[%c0, %c0_0] : memref<128x128xf32, #tpu.memory_space<vmem>>, vector<128x128xf32>
    tpu.vector_store %arg4[%c0, %c0_0], %0 {strides = array<i32>} : memref<128x128xf32, #tpu.memory_space<vmem>>, vector<128x128xf32>,
    %c0_1 = arith.constant 0 : index
    %c0_2 = arith.constant 0 : index
    %2 = vector.load %arg1[%c0_1, %c0_2] : memref<32x32xf32, #tpu.memory_space<vmem>>, vector<32x32xf32>
    %c0_3 = arith.constant 0 : index
    %c0_4 = arith.constant 0 : index
    %3 = vector.load %arg4[%c0_3, %c0_4] : memref<128x128xf32, #tpu.memory_space<vmem>>, vector<32x32xf32>
    tpu.vector_store %arg4[%c0_3, %c0_4], %2 {strides = array<i32>} : memref<128x128xf32, #tpu.memory_space<vmem>>, vector<32x32xf32>,
    %c32 = arith.constant 32 : index
    %c32_5 = arith.constant 32 : index
    %4 = vector.load %arg4[%c32, %c32_5] : memref<128x128xf32, #tpu.memory_space<vmem>>, vector<32x32xf32>
    tpu.vector_store %arg4[%c32, %c32_5], %2 {strides = array<i32>} : memref<128x128xf32, #tpu.memory_space<vmem>>, vector<32x32xf32>,
    %c0_6 = arith.constant 0 : index
    %c0_7 = arith.constant 0 : index
    %5 = vector.load %arg2[%c0_6, %c0_7] : memref<16x16xf32, #tpu.memory_space<vmem>>, vector<16x16xf32>
    %c64 = arith.constant 64 : index
    %c96 = arith.constant 96 : index
    %6 = vector.load %arg4[%c64, %c96] : memref<128x128xf32, #tpu.memory_space<vmem>>, vector<16x16xf32>
    tpu.vector_store %arg4[%c64, %c96], %5 {strides = array<i32>} : memref<128x128xf32, #tpu.memory_space<vmem>>, vector<16x16xf32>,
    %c0_8 = arith.constant 0 : index
    %c0_9 = arith.constant 0 : index
    %7 = vector.load %arg0[%c0_8, %c0_9] : memref<16x3xi32, #tpu.memory_space<vmem>>, vector<16x3xi32>
    %8 = tpu.iota {dimensions = array<i32: 1>} : vector<16x128xi32>
    %9 = vector.extract_strided_slice %7 {offsets = [0, 0], sizes = [16, 1], strides = [1, 1]} : vector<16x3xi32> to vector<16x1xi32>
    %10 = vector.broadcast %9 : vector<16x1xi32> to vector<16x128xi32>
    %11 = arith.cmpi eq, %8, %10 : vector<16x128xi32>
    %12 = vector.extract_strided_slice %7 {offsets = [0, 1], sizes = [16, 1], strides = [1, 1]} : vector<16x3xi32> to vector<16x1xi32>
    %13 = vector.broadcast %12 : vector<16x1xi32> to vector<16x128xi32>
    %14 = arith.cmpi eq, %8, %13 : vector<16x128xi32>
    %15 = arith.ori %11, %14 : vector<16x128xi1>
    %16 = vector.extract_strided_slice %7 {offsets = [0, 2], sizes = [16, 1], strides = [1, 1]} : vector<16x3xi32> to vector<16x1xi32>
    %17 = vector.broadcast %16 : vector<16x1xi32> to vector<16x128xi32>
    %18 = arith.cmpi eq, %8, %17 : vector<16x128xi32>
    %19 = arith.ori %15, %18 : vector<16x128xi1>
    %20 = arith.extui %19 : vector<16x128xi1> to vector<16x128xi32>
    %21 = arith.sitofp %20 : vector<16x128xi32> to vector<16x128xf32>
    %c0_10 = arith.constant 0 : index
    %c0_11 = arith.constant 0 : index
    %22 = vector.load %arg4[%c0_10, %c0_11] : memref<128x128xf32, #tpu.memory_space<vmem>>, vector<128x128xf32>
    %cst_12 = arith.constant dense<0.000000e+00> : vector<16x128xf32>
    %23 = tpu.matmul %21, %22, %cst_12 {dimension_numbers = #tpu.dot_dimension_numbers<[1], [0], [0], [1], [0, 0, 1, 1], [], []>, precision = #tpu.contract_precision<fp32>} : vector<16x128xf32>, vector<128x128xf32>, vector<16x128xf32> -> vector<16x128xf32>
    %c0_13 = arith.constant 0 : index
    %c0_14 = arith.constant 0 : index
    %24 = vector.load %arg3[%c0_13, %c0_14] : memref<16x128xf32, #tpu.memory_space<vmem>>, vector<16x128xf32>
    tpu.vector_store %arg3[%c0_13, %c0_14], %23 {strides = array<i32>} : memref<16x128xf32, #tpu.memory_space<vmem>>, vector<16x128xf32>,
    %25 = vector.extract_strided_slice %23 {offsets = [0, 0], sizes = [16, 32], strides = [1, 1]} : vector<16x128xf32> to vector<16x32xf32>
    %26 = vector.extract_strided_slice %23 {offsets = [0, 32], sizes = [16, 32], strides = [1, 1]} : vector<16x128xf32> to vector<16x32xf32>
    %27 = arith.mulf %25, %26 : vector<16x32xf32>
    %c0_15 = arith.constant 0 : index
    %c64_16 = arith.constant 64 : index
    %28 = vector.load %arg3[%c0_15, %c64_16] : memref<16x128xf32, #tpu.memory_space<vmem>>, vector<16x32xf32>
    tpu.vector_store %arg3[%c0_15, %c64_16], %27 {strides = array<i32>} : memref<16x128xf32, #tpu.memory_space<vmem>>, vector<16x32xf32>,
    return
  }
}

</mosaic_0001>

<llo_original>
// kernel: endpoint_span_extractor_padded.1
$region0: #{endpoint_span_extractor_padded.1}
  #allocation0 [shape = 'u32[]', space=smem, size = 0x4, offset = 0x4, fixed_abs, tag = 'smem constant byte address 0x4 - core index']
  #allocation1 [shape = 'u32[144,128]{1,0:T(1,128)}', space=vmem, size = 0x12000, scoped, tag = 'internal scratch']
  #allocation2 [shape = 'f32[128,128]{1,0:T(8,128)}', space=vmem, size = 0x10000, scoped, tag = 'scratch operand']
  %s0 = inlined_call_operand.vmem [shape: s32[16,3], index: 0, kind: input, shape index: {}]
  %s1 = inlined_call_operand.vmem [shape: f32[32,32], index: 1, kind: input, shape index: {}]
  %s2 = inlined_call_operand.vmem [shape: f32[16,16], index: 2, kind: input, shape index: {}]
  %s3 = inlined_call_operand.hbm [shape: f32[16,128], index: 3, kind: output, shape index: {}]
  %s4 = sld [smem:[#allocation0]]
  $region22: #{endpoint_span_extractor_padded.1} parent=0
    _
  %s6 = ssub.s32 1, %s4
  %s7 = scalar_select 0, %s6, %s4
  $region1: #{endpoint_span_extractor_padded.1} parent=0
    #allocation3 [shape = 'u8[8192]{0}', space=vmem, size = 0x2000, scoped, tag = 'output window, operand 0, single buffered']
    #allocation4 [shape = 's32[1]{0}', space=sflag, size = 0x4, scoped, tag = 'scoped memory for endpoint_span_extractor_padded.1']
    %8 = vsyncpa [#allocation4], 0
    // Predicated region
    $region2: #{endpoint_span_extractor_padded.1} parent=1 // pred_check
      _
    $region3: #{endpoint_span_extractor_padded.1} parent=1 // pred_check_branch
      %10 = sbr.rel (0) target = $region5
    $region4: #{endpoint_span_extractor_padded.1} parent=1 // pred_region
      _
    $region5: #{endpoint_span_extractor_padded.1} parent=1 // pred_fallthru
      _
    // Predicated region
    $region6: #{endpoint_span_extractor_padded.1} parent=1 // pred_check
      _
    $region7: #{endpoint_span_extractor_padded.1} parent=1 // pred_check_branch
      %12 = sbr.rel (0) target = $region9
    $region8: #{endpoint_span_extractor_padded.1} parent=1 // pred_region
      _
    $region9: #{endpoint_span_extractor_padded.1} parent=1 // pred_fallthru
      _
    // Predicated region
    $region10: #{endpoint_span_extractor_padded.1} parent=1 // pred_check
      _
    $region11: #{endpoint_span_extractor_padded.1} parent=1 // pred_check_branch
      %14 = sbr.rel (0) target = $region13
    $region12: #{endpoint_span_extractor_padded.1} parent=1 // pred_region
      _
    $region13: #{endpoint_span_extractor_padded.1} parent=1 // pred_fallthru
      _
    %15 = vst [vmem:[#allocation2] sm:$0xff] 0.0
    %16 = vst [vmem:[#allocation2 + $0x8] sm:$0xff] 0.0
    %17 = vst [vmem:[#allocation2 + $0x10] sm:$0xff] 0.0
    %18 = vst [vmem:[#allocation2 + $0x18] sm:$0xff] 0.0
    %19 = vst [vmem:[#allocation2 + $0x20] sm:$0xff] 0.0
    %20 = vst [vmem:[#allocation2 + $0x28] sm:$0xff] 0.0
    %21 = vst [vmem:[#allocation2 + $0x30] sm:$0xff] 0.0
    %22 = vst [vmem:[#allocation2 + $0x38] sm:$0xff] 0.0
    %23 = vst [vmem:[#allocation2 + $0x40] sm:$0xff] 0.0
    %24 = vst [vmem:[#allocation2 + $0x48] sm:$0xff] 0.0
    %25 = vst [vmem:[#allocation2 + $0x50] sm:$0xff] 0.0
    %26 = vst [vmem:[#allocation2 + $0x58] sm:$0xff] 0.0
    %27 = vst [vmem:[#allocation2 + $0x60] sm:$0xff] 0.0
    %28 = vst [vmem:[#allocation2 + $0x68] sm:$0xff] 0.0
    %29 = vst [vmem:[#allocation2 + $0x70] sm:$0xff] 0.0
    %30 = vst [vmem:[#allocation2 + $0x78] sm:$0xff] 0.0
    %v31 = vld [vmem:[%s1] sm:$0xff]
    %v32 = vld [vmem:[%s1 + $0x8] sm:$0xff]
    %v33 = vld [vmem:[%s1 + $0x10] sm:$0xff]
    %v34 = vld [vmem:[%s1 + $0x18] sm:$0xff]
    %vm35 = vcmask 261120
    %36 = vst.msk [vmem:[#allocation2] sm:$0xff] %vm35, %v31
    %37 = vst.msk [vmem:[#allocation2 + $0x8] sm:$0xff] %vm35, %v32
    %38 = vst.msk [vmem:[#allocation2 + $0x10] sm:$0xff] %vm35, %v33
    %39 = vst.msk [vmem:[#allocation2 + $0x18] sm:$0xff] %vm35, %v34
    %44 = vrot.lane.b32.xlu0 %v31, 32
    %v45 = vpop.permute.xlu0 %44
    %46 = vrot.lane.b32.xlu0 %v32, 32
    %v47 = vpop.permute.xlu0 %46
    %48 = vrot.lane.b32.xlu0 %v33, 32
    %v49 = vpop.permute.xlu0 %48
    %50 = vrot.lane.b32.xlu0 %v34, 32
    %v51 = vpop.permute.xlu0 %50
    %vm56 = vcmask 523520
    %57 = vst.msk [vmem:[#allocation2 + $0x20] sm:$0xff] %vm56, %v45
    %58 = vst.msk [vmem:[#allocation2 + $0x28] sm:$0xff] %vm56, %v47
    %59 = vst.msk [vmem:[#allocation2 + $0x30] sm:$0xff] %vm56, %v49
    %60 = vst.msk [vmem:[#allocation2 + $0x38] sm:$0xff] %vm56, %v51
    %v61 = vld [vmem:[%s2] sm:$0xff]
    %v62 = vld [vmem:[%s2 + $0x8] sm:$0xff]
    %65 = vrot.lane.b32.xlu0 %v61, 96
    %v66 = vpop.permute.xlu0 %65
    %67 = vrot.lane.b32.xlu0 %v62, 96
    %v68 = vpop.permute.xlu0 %67
    %vm71 = vcmask 917248
    %72 = vst.msk [vmem:[#allocation2 + $0x40] sm:$0xff] %vm71, %v66
    %73 = vst.msk [vmem:[#allocation2 + $0x48] sm:$0xff] %vm71, %v68
    %v74 = vld [vmem:[%s0] sm:$0xff]
    %v75 = vld [vmem:[%s0 + $0x8] sm:$0xff]
    %v76 = vlaneseq
    %v77 = vand.u32 %v76, 127
    %78 = vset.pattern.permute.xlu0 0
    %79 = vperm.xlu0 %78, %v74
    %v80 = vpop.permute.xlu0 %79
    %81 = vset.pattern.permute.xlu0 0
    %82 = vperm.xlu0 %81, %v75
    %v83 = vpop.permute.xlu0 %82
    %vm84 = vcmp.eq.s32.totalorder %v77, %v80
    %vm85 = vcmp.eq.s32.totalorder %v77, %v83
    %86 = vset.pattern.permute.xlu0 1
    %87 = vperm.xlu0 %86, %v74
    %v88 = vpop.permute.xlu0 %87
    %89 = vset.pattern.permute.xlu0 1
    %90 = vperm.xlu0 %89, %v75
    %v91 = vpop.permute.xlu0 %90
    %vm92 = vcmp.eq.s32.totalorder %v77, %v88
    %vm93 = vcmp.eq.s32.totalorder %v77, %v91
    %vm94 = vmor %vm84, %vm92
    %vm95 = vmor %vm85, %vm93
    %96 = vset.pattern.permute.xlu0 2
    %97 = vperm.xlu0 %96, %v74
    %v98 = vpop.permute.xlu0 %97
    %99 = vset.pattern.permute.xlu0 2
    %100 = vperm.xlu0 %99, %v75
    %v101 = vpop.permute.xlu0 %100
    %vm102 = vcmp.eq.s32.totalorder %v77, %v98
    %vm103 = vcmp.eq.s32.totalorder %v77, %v101
    %vm104 = vmor %vm94, %vm102
    %vm105 = vmor %vm95, %vm103
    %v106 = vsel %vm104, 1, 0
    %v107 = vsel %vm105, 1, 0
    %v108 = vcvt.s32.f32 %v106
    %v109 = vcvt.s32.f32 %v107
    %v110 = vld [vmem:[#allocation2] sm:$0xff]
    %v111 = vld [vmem:[#allocation2 + $0x8] sm:$0xff]
    %v112 = vld [vmem:[#allocation2 + $0x10] sm:$0xff]
    %v113 = vld [vmem:[#allocation2 + $0x18] sm:$0xff]
    %v114 = vld [vmem:[#allocation2 + $0x20] sm:$0xff]
    %v115 = vld [vmem:[#allocation2 + $0x28] sm:$0xff]
    %v116 = vld [vmem:[#allocation2 + $0x30] sm:$0xff]
    %v117 = vld [vmem:[#allocation2 + $0x38] sm:$0xff]
    %v118 = vld [vmem:[#allocation2 + $0x40] sm:$0xff]
    %v119 = vld [vmem:[#allocation2 + $0x48] sm:$0xff]
    %v120 = vld [vmem:[#allocation2 + $0x50] sm:$0xff]
    %v121 = vld [vmem:[#allocation2 + $0x58] sm:$0xff]
    %v122 = vld [vmem:[#allocation2 + $0x60] sm:$0xff]
    %v123 = vld [vmem:[#allocation2 + $0x68] sm:$0xff]
    %v124 = vld [vmem:[#allocation2 + $0x70] sm:$0xff]
    %v125 = vld [vmem:[#allocation2 + $0x78] sm:$0xff]
    %126 = vmatprep.subr.mxu0 0.0
    %v127 = vand.u32 %v125, 4294901760
    %128 = vmatpush1.msra.mxu0 %v127
    %129 = vmatprep.subr.mxu0 0.0
    %v130 = vand.u32 %v124, 4294901760
    %131 = vmatpush1.msra.mxu0 %v130
    %132 = vmatprep.subr.mxu0 0.0
    %v133 = vand.u32 %v123, 4294901760
    %134 = vmatpush1.msra.mxu0 %v133
    %135 = vmatprep.subr.mxu0 0.0
    %v136 = vand.u32 %v122, 4294901760
    %137 = vmatpush1.msra.mxu0 %v136
    %138 = vmatprep.subr.mxu0 0.0
    %v139 = vand.u32 %v121, 4294901760
    %140 = vmatpush1.msra.mxu0 %v139
    %141 = vmatprep.subr.mxu0 0.0
    %v142 = vand.u32 %v120, 4294901760
    %143 = vmatpush1.msra.mxu0 %v142
    %144 = vmatprep.subr.mxu0 0.0
    %v145 = vand.u32 %v119, 4294901760
    %146 = vmatpush1.msra.mxu0 %v145
    %147 = vmatprep.subr.mxu0 0.0
    %v148 = vand.u32 %v118, 4294901760
    %149 = vmatpush1.msra.mxu0 %v148
    %150 = vmatprep.subr.mxu0 0.0
    %v151 = vand.u32 %v117, 4294901760
    %152 = vmatpush1.msra.mxu0 %v151
    %153 = vmatprep.subr.mxu0 0.0
    %v154 = vand.u32 %v116, 4294901760
    %155 = vmatpush1.msra.mxu0 %v154
    %156 = vmatprep.subr.mxu0 0.0
    %v157 = vand.u32 %v115, 4294901760
    %158 = vmatpush1.msra.mxu0 %v157
    %159 = vmatprep.subr.mxu0 0.0
    %v160 = vand.u32 %v114, 4294901760
    %161 = vmatpush1.msra.mxu0 %v160
    %162 = vmatprep.subr.mxu0 0.0
    %v163 = vand.u32 %v113, 4294901760
    %164 = vmatpush1.msra.mxu0 %v163
    %165 = vmatprep.subr.mxu0 0.0
    %v166 = vand.u32 %v112, 4294901760
    %167 = vmatpush1.msra.mxu0 %v166
    %168 = vmatprep.subr.mxu0 0.0
    %v169 = vand.u32 %v111, 4294901760
    %170 = vmatpush1.msra.mxu0 %v169
    %171 = vmatprep.subr.mxu0 0.0
    %v172 = vand.u32 %v110, 4294901760
    %173 = vmatpush1.msra.mxu0 %v172
    %174 = vmatprep.subr.mxu0 0.0
    %175 = vmatpush2.msra.mxu0 0.0
    %176 = vmatprep.subr.mxu0 0.0
    %177 = vmatpush2.msra.mxu0 0.0
    %178 = vmatprep.subr.mxu0 0.0
    %179 = vmatpush2.msra.mxu0 0.0
    %180 = vmatprep.subr.mxu0 0.0
    %181 = vmatpush2.msra.mxu0 0.0
    %182 = vmatprep.subr.mxu0 0.0
    %183 = vmatpush2.msra.mxu0 0.0
    %184 = vmatprep.subr.mxu0 0.0
    %185 = vmatpush2.msra.mxu0 0.0
    %186 = vmatprep.subr.mxu0 0.0
    %187 = vmatpush2.msra.mxu0 0.0
    %188 = vmatprep.subr.mxu0 0.0
    %189 = vmatpush2.msra.mxu0 0.0
    %190 = vmatprep.subr.mxu0 0.0
    %191 = vmatpush2.msra.mxu0 0.0
    %192 = vmatprep.subr.mxu0 0.0
    %193 = vmatpush2.msra.mxu0 0.0
    %194 = vmatprep.subr.mxu0 0.0
    %195 = vmatpush2.msra.mxu0 0.0
    %196 = vmatprep.subr.mxu0 0.0
    %197 = vmatpush2.msra.mxu0 0.0
    %198 = vmatprep.subr.mxu0 0.0
    %199 = vmatpush2.msra.mxu0 0.0
    %200 = vmatprep.subr.mxu0 0.0
    %201 = vmatpush2.msra.mxu0 0.0
    %202 = vmatprep.subr.mxu0 0.0
    %203 = vmatpush2.msra.mxu0 0.0
    %204 = vmatprep.subr.mxu0 0.0
    %205 = vmatpush2.msra.mxu0 0.0
    %206 = vmatprep.mubr.f32.mxu0 0.0
    %v207 = vand.u32 %v108, 4294901760
    %v208 = vsub.f32 %v108, %v207
    %v209 = vand.u32 %v208, 4294901760
    %v210 = vsub.f32 %v208, %v209
    %v211 = vand.u32 %v210, 4294901760
    %212 = vmatmul.mubr.f32.gmra.mxu0 %v211
    %v213 = vpop.f32.mrf.mxu0
    %v214 = vadd.f32 0.0, %v213
    %v215 = vpop.f32.mrf.mxu0
    %216 = vmatprep.mubr.f32.mxu0 0.0
    %v217 = vand.u32 %v109, 4294901760
    %v218 = vsub.f32 %v109, %v217
    %v219 = vand.u32 %v218, 4294901760
    %v220 = vsub.f32 %v218, %v219
    %v221 = vand.u32 %v220, 4294901760
    %222 = vmatmul.mubr.f32.gmra.mxu0 %v221
    %v223 = vpop.f32.mrf.mxu0
    %v224 = vadd.f32 0.0, %v223
    %v225 = vpop.f32.mrf.mxu0
    %226 = vdwg.mxu0
    %227 = vmatprep.subr.mxu0 0.0
    %v228 = vand.u32 %v125, 4294901760
    %v229 = vsub.f32 %v125, %v228
    %v230 = vand.u32 %v229, 4294901760
    %v231 = vsub.f32 %v229, %v230
    %v232 = vand.u32 %v231, 4294901760
    %233 = vmatpush1.msra.mxu0 %v232
    %234 = vmatprep.subr.mxu0 0.0
    %v235 = vand.u32 %v124, 4294901760
    %v236 = vsub.f32 %v124, %v235
    %v237 = vand.u32 %v236, 4294901760
    %v238 = vsub.f32 %v236, %v237
    %v239 = vand.u32 %v238, 4294901760
    %240 = vmatpush1.msra.mxu0 %v239
    %241 = vmatprep.subr.mxu0 0.0
    %v242 = vand.u32 %v123, 4294901760
    %v243 = vsub.f32 %v123, %v242
    %v244 = vand.u32 %v243, 4294901760
    %v245 = vsub.f32 %v243, %v244
    %v246 = vand.u32 %v245, 4294901760
    %247 = vmatpush1.msra.mxu0 %v246
    %248 = vmatprep.subr.mxu0 0.0
    %v249 = vand.u32 %v122, 4294901760
    %v250 = vsub.f32 %v122, %v249
    %v251 = vand.u32 %v250, 4294901760
    %v252 = vsub.f32 %v250, %v251
    %v253 = vand.u32 %v252, 4294901760
    %254 = vmatpush1.msra.mxu0 %v253
    %255 = vmatprep.subr.mxu0 0.0
    %v256 = vand.u32 %v121, 4294901760
    %v257 = vsub.f32 %v121, %v256
    %v258 = vand.u32 %v257, 4294901760
    %v259 = vsub.f32 %v257, %v258
    %v260 = vand.u32 %v259, 4294901760
    %261 = vmatpush1.msra.mxu0 %v260
    %262 = vmatprep.subr.mxu0 0.0
    %v263 = vand.u32 %v120, 4294901760
    %v264 = vsub.f32 %v120, %v263
    %v265 = vand.u32 %v264, 4294901760
    %v266 = vsub.f32 %v264, %v265
    %v267 = vand.u32 %v266, 4294901760
    %268 = vmatpush1.msra.mxu0 %v267
    %269 = vmatprep.subr.mxu0 0.0
    %v270 = vand.u32 %v119, 4294901760
    %v271 = vsub.f32 %v119, %v270
    %v272 = vand.u32 %v271, 4294901760
    %v273 = vsub.f32 %v271, %v272
    %v274 = vand.u32 %v273, 4294901760
    %275 = vmatpush1.msra.mxu0 %v274
    %276 = vmatprep.subr.mxu0 0.0
    %v277 = vand.u32 %v118, 4294901760
    %v278 = vsub.f32 %v118, %v277
    %v279 = vand.u32 %v278, 4294901760
    %v280 = vsub.f32 %v278, %v279
    %v281 = vand.u32 %v280, 4294901760
    %282 = vmatpush1.msra.mxu0 %v281
    %283 = vmatprep.subr.mxu0 0.0
    %v284 = vand.u32 %v117, 4294901760
    %v285 = vsub.f32 %v117, %v284
    %v286 = vand.u32 %v285, 4294901760
    %v287 = vsub.f32 %v285, %v286
    %v288 = vand.u32 %v287, 4294901760
    %289 = vmatpush1.msra.mxu0 %v288
    %290 = vmatprep.subr.mxu0 0.0
    %v291 = vand.u32 %v116, 4294901760
    %v292 = vsub.f32 %v116, %v291
    %v293 = vand.u32 %v292, 4294901760
    %v294 = vsub.f32 %v292, %v293
    %v295 = vand.u32 %v294, 4294901760
    %296 = vmatpush1.msra.mxu0 %v295
    %297 = vmatprep.subr.mxu0 0.0
    %v298 = vand.u32 %v115, 4294901760
    %v299 = vsub.f32 %v115, %v298
    %v300 = vand.u32 %v299, 4294901760
    %v301 = vsub.f32 %v299, %v300
    %v302 = vand.u32 %v301, 4294901760
    %303 = vmatpush1.msra.mxu0 %v302
    %304 = vmatprep.subr.mxu0 0.0
    %v305 = vand.u32 %v114, 4294901760
    %v306 = vsub.f32 %v114, %v305
    %v307 = vand.u32 %v306, 4294901760
    %v308 = vsub.f32 %v306, %v307
    %v309 = vand.u32 %v308, 4294901760
    %310 = vmatpush1.msra.mxu0 %v309
    %311 = vmatprep.subr.mxu0 0.0
    %v312 = vand.u32 %v113, 4294901760
    %v313 = vsub.f32 %v113, %v312
    %v314 = vand.u32 %v313, 4294901760
    %v315 = vsub.f32 %v313, %v314
    %v316 = vand.u32 %v315, 4294901760
    %317 = vmatpush1.msra.mxu0 %v316
    %318 = vmatprep.subr.mxu0 0.0
    %v319 = vand.u32 %v112, 4294901760
    %v320 = vsub.f32 %v112, %v319
    %v321 = vand.u32 %v320, 4294901760
    %v322 = vsub.f32 %v320, %v321
    %v323 = vand.u32 %v322, 4294901760
    %324 = vmatpush1.msra.mxu0 %v323
    %325 = vmatprep.subr.mxu0 0.0
    %v326 = vand.u32 %v111, 4294901760
    %v327 = vsub.f32 %v111, %v326
    %v328 = vand.u32 %v327, 4294901760
    %v329 = vsub.f32 %v327, %v328
    %v330 = vand.u32 %v329, 4294901760
    %331 = vmatpush1.msra.mxu0 %v330
    %332 = vmatprep.subr.mxu0 0.0
    %v333 = vand.u32 %v110, 4294901760
    %v334 = vsub.f32 %v110, %v333
    %v335 = vand.u32 %v334, 4294901760
    %v336 = vsub.f32 %v334, %v335
    %v337 = vand.u32 %v336, 4294901760
    %338 = vmatpush1.msra.mxu0 %v337
    %339 = vmatprep.subr.mxu0 0.0
    %340 = vmatpush2.msra.mxu0 0.0
    %341 = vmatprep.subr.mxu0 0.0
    %342 = vmatpush2.msra.mxu0 0.0
    %343 = vmatprep.subr.mxu0 0.0
    %344 = vmatpush2.msra.mxu0 0.0
    %345 = vmatprep.subr.mxu0 0.0
    %346 = vmatpush2.msra.mxu0 0.0
    %347 = vmatprep.subr.mxu0 0.0
    %348 = vmatpush2.msra.mxu0 0.0
    %349 = vmatprep.subr.mxu0 0.0
    %350 = vmatpush2.msra.mxu0 0.0
    %351 = vmatprep.subr.mxu0 0.0
    %352 = vmatpush2.msra.mxu0 0.0
    %353 = vmatprep.subr.mxu0 0.0
    %354 = vmatpush2.msra.mxu0 0.0
    %355 = vmatprep.subr.mxu0 0.0
    %356 = vmatpush2.msra.mxu0 0.0
    %357 = vmatprep.subr.mxu0 0.0
    %358 = vmatpush2.msra.mxu0 0.0
    %359 = vmatprep.subr.mxu0 0.0
    %360 = vmatpush2.msra.mxu0 0.0
    %361 = vmatprep.subr.mxu0 0.0
    %362 = vmatpush2.msra.mxu0 0.0
    %363 = vmatprep.subr.mxu0 0.0
    %364 = vmatpush2.msra.mxu0 0.0
    %365 = vmatprep.subr.mxu0 0.0
    %366 = vmatpush2.msra.mxu0 0.0
    %367 = vmatprep.subr.mxu0 0.0
    %368 = vmatpush2.msra.mxu0 0.0
    %369 = vmatprep.subr.mxu0 0.0
    %370 = vmatpush2.msra.mxu0 0.0
    %371 = vmatprep.mubr.f32.mxu0 0.0
    %v372 = vand.u32 %v108, 4294901760
    %373 = vmatmul.mubr.f32.gmra.mxu0 %v372
    %v374 = vpop.f32.mrf.mxu0
    %v375 = vadd.f32 %v214, %v374
    %v376 = vpop.f32.mrf.mxu0
    %377 = vmatprep.mubr.f32.mxu0 0.0
    %v378 = vand.u32 %v109, 4294901760
    %379 = vmatmul.mubr.f32.gmra.mxu0 %v378
    %v380 = vpop.f32.mrf.mxu0
    %v381 = vadd.f32 %v224, %v380
    %v382 = vpop.f32.mrf.mxu0
    %383 = vdwg.mxu0
    %384 = vmatprep.subr.mxu0 0.0
    %v385 = vand.u32 %v125, 4294901760
    %v386 = vsub.f32 %v125, %v385
    %387 = vmatpush1.msra.mxu0 %v386
    %388 = vmatprep.subr.mxu0 0.0
    %v389 = vand.u32 %v124, 4294901760
    %v390 = vsub.f32 %v124, %v389
    %391 = vmatpush1.msra.mxu0 %v390
    %392 = vmatprep.subr.mxu0 0.0
    %v393 = vand.u32 %v123, 4294901760
    %v394 = vsub.f32 %v123, %v393
    %395 = vmatpush1.msra.mxu0 %v394
    %396 = vmatprep.subr.mxu0 0.0
    %v397 = vand.u32 %v122, 4294901760
    %v398 = vsub.f32 %v122, %v397
    %399 = vmatpush1.msra.mxu0 %v398
    %400 = vmatprep.subr.mxu0 0.0
    %v401 = vand.u32 %v121, 4294901760
    %v402 = vsub.f32 %v121, %v401
    %403 = vmatpush1.msra.mxu0 %v402
    %404 = vmatprep.subr.mxu0 0.0
    %v405 = vand.u32 %v120, 4294901760
    %v406 = vsub.f32 %v120, %v405
    %407 = vmatpush1.msra.mxu0 %v406
    %408 = vmatprep.subr.mxu0 0.0
    %v409 = vand.u32 %v119, 4294901760
    %v410 = vsub.f32 %v119, %v409
    %411 = vmatpush1.msra.mxu0 %v410
    %412 = vmatprep.subr.mxu0 0.0
    %v413 = vand.u32 %v118, 4294901760
    %v414 = vsub.f32 %v118, %v413
    %415 = vmatpush1.msra.mxu0 %v414
    %416 = vmatprep.subr.mxu0 0.0
    %v417 = vand.u32 %v117, 4294901760
    %v418 = vsub.f32 %v117, %v417
    %419 = vmatpush1.msra.mxu0 %v418
    %420 = vmatprep.subr.mxu0 0.0
    %v421 = vand.u32 %v116, 4294901760
    %v422 = vsub.f32 %v116, %v421
    %423 = vmatpush1.msra.mxu0 %v422
    %424 = vmatprep.subr.mxu0 0.0
    %v425 = vand.u32 %v115, 4294901760
    %v426 = vsub.f32 %v115, %v425
    %427 = vmatpush1.msra.mxu0 %v426
    %428 = vmatprep.subr.mxu0 0.0
    %v429 = vand.u32 %v114, 4294901760
    %v430 = vsub.f32 %v114, %v429
    %431 = vmatpush1.msra.mxu0 %v430
    %432 = vmatprep.subr.mxu0 0.0
    %v433 = vand.u32 %v113, 4294901760
    %v434 = vsub.f32 %v113, %v433
    %435 = vmatpush1.msra.mxu0 %v434
    %436 = vmatprep.subr.mxu0 0.0
    %v437 = vand.u32 %v112, 4294901760
    %v438 = vsub.f32 %v112, %v437
    %439 = vmatpush1.msra.mxu0 %v438
    %440 = vmatprep.subr.mxu0 0.0
    %v441 = vand.u32 %v111, 4294901760
    %v442 = vsub.f32 %v111, %v441
    %443 = vmatpush1.msra.mxu0 %v442
    %444 = vmatprep.subr.mxu0 0.0
    %v445 = vand.u32 %v110, 4294901760
    %v446 = vsub.f32 %v110, %v445
    %447 = vmatpush1.msra.mxu0 %v446
    %448 = vmatprep.subr.mxu0 0.0
    %449 = vmatpush2.msra.mxu0 0.0
    %450 = vmatprep.subr.mxu0 0.0
    %451 = vmatpush2.msra.mxu0 0.0
    %452 = vmatprep.subr.mxu0 0.0
    %453 = vmatpush2.msra.mxu0 0.0
    %454 = vmatprep.subr.mxu0 0.0
    %455 = vmatpush2.msra.mxu0 0.0
    %456 = vmatprep.subr.mxu0 0.0
    %457 = vmatpush2.msra.mxu0 0.0
    %458 = vmatprep.subr.mxu0 0.0
    %459 = vmatpush2.msra.mxu0 0.0
    %460 = vmatprep.subr.mxu0 0.0
    %461 = vmatpush2.msra.mxu0 0.0
    %462 = vmatprep.subr.mxu0 0.0
    %463 = vmatpush2.msra.mxu0 0.0
    %464 = vmatprep.subr.mxu0 0.0
    %465 = vmatpush2.msra.mxu0 0.0
    %466 = vmatprep.subr.mxu0 0.0
    %467 = vmatpush2.msra.mxu0 0.0
    %468 = vmatprep.subr.mxu0 0.0
    %469 = vmatpush2.msra.mxu0 0.0
    %470 = vmatprep.subr.mxu0 0.0
    %471 = vmatpush2.msra.mxu0 0.0
    %472 = vmatprep.subr.mxu0 0.0
    %473 = vmatpush2.msra.mxu0 0.0
    %474 = vmatprep.subr.mxu0 0.0
    %475 = vmatpush2.msra.mxu0 0.0
    %476 = vmatprep.subr.mxu0 0.0
    %477 = vmatpush2.msra.mxu0 0.0
    %478 = vmatprep.subr.mxu0 0.0
    %479 = vmatpush2.msra.mxu0 0.0
    %480 = vmatprep.mubr.f32.mxu0 0.0
    %v481 = vand.u32 %v108, 4294901760
    %v482 = vsub.f32 %v108, %v481
    %483 = vmatmul.mubr.f32.gmra.mxu0 %v482
    %v484 = vpop.f32.mrf.mxu0
    %v485 = vadd.f32 %v375, %v484
    %v486 = vpop.f32.mrf.mxu0
    %487 = vmatprep.mubr.f32.mxu0 0.0
    %v488 = vand.u32 %v109, 4294901760
    %v489 = vsub.f32 %v109, %v488
    %490 = vmatmul.mubr.f32.gmra.mxu0 %v489
    %v491 = vpop.f32.mrf.mxu0
    %v492 = vadd.f32 %v381, %v491
    %v493 = vpop.f32.mrf.mxu0
    %494 = vdwg.mxu0
    %495 = vmatprep.subr.mxu0 0.0
    %v496 = vand.u32 %v125, 4294901760
    %497 = vmatpush1.msra.mxu0 %v496
    %498 = vmatprep.subr.mxu0 0.0
    %v499 = vand.u32 %v124, 4294901760
    %500 = vmatpush1.msra.mxu0 %v499
    %501 = vmatprep.subr.mxu0 0.0
    %v502 = vand.u32 %v123, 4294901760
    %503 = vmatpush1.msra.mxu0 %v502
    %504 = vmatprep.subr.mxu0 0.0
    %v505 = vand.u32 %v122, 4294901760
    %506 = vmatpush1.msra.mxu0 %v505
    %507 = vmatprep.subr.mxu0 0.0
    %v508 = vand.u32 %v121, 4294901760
    %509 = vmatpush1.msra.mxu0 %v508
    %510 = vmatprep.subr.mxu0 0.0
    %v511 = vand.u32 %v120, 4294901760
    %512 = vmatpush1.msra.mxu0 %v511
    %513 = vmatprep.subr.mxu0 0.0
    %v514 = vand.u32 %v119, 4294901760
    %515 = vmatpush1.msra.mxu0 %v514
    %516 = vmatprep.subr.mxu0 0.0
    %v517 = vand.u32 %v118, 4294901760
    %518 = vmatpush1.msra.mxu0 %v517
    %519 = vmatprep.subr.mxu0 0.0
    %v520 = vand.u32 %v117, 4294901760
    %521 = vmatpush1.msra.mxu0 %v520
    %522 = vmatprep.subr.mxu0 0.0
    %v523 = vand.u32 %v116, 4294901760
    %524 = vmatpush1.msra.mxu0 %v523
    %525 = vmatprep.subr.mxu0 0.0
    %v526 = vand.u32 %v115, 4294901760
    %527 = vmatpush1.msra.mxu0 %v526
    %528 = vmatprep.subr.mxu0 0.0
    %v529 = vand.u32 %v114, 4294901760
    %530 = vmatpush1.msra.mxu0 %v529
    %531 = vmatprep.subr.mxu0 0.0
    %v532 = vand.u32 %v113, 4294901760
    %533 = vmatpush1.msra.mxu0 %v532
    %534 = vmatprep.subr.mxu0 0.0
    %v535 = vand.u32 %v112, 4294901760
    %536 = vmatpush1.msra.mxu0 %v535
    %537 = vmatprep.subr.mxu0 0.0
    %v538 = vand.u32 %v111, 4294901760
    %539 = vmatpush1.msra.mxu0 %v538
    %540 = vmatprep.subr.mxu0 0.0
    %v541 = vand.u32 %v110, 4294901760
    %542 = vmatpush1.msra.mxu0 %v541
    %543 = vmatprep.subr.mxu0 0.0
    %544 = vmatpush2.msra.mxu0 0.0
    %545 = vmatprep.subr.mxu0 0.0
    %546 = vmatpush2.msra.mxu0 0.0
    %547 = vmatprep.subr.mxu0 0.0
    %548 = vmatpush2.msra.mxu0 0.0
    %549 = vmatprep.subr.mxu0 0.0
    %550 = vmatpush2.msra.mxu0 0.0
    %551 = vmatprep.subr.mxu0 0.0
    %552 = vmatpush2.msra.mxu0 0.0
    %553 = vmatprep.subr.mxu0 0.0
    %554 = vmatpush2.msra.mxu0 0.0
    %555 = vmatprep.subr.mxu0 0.0
    %556 = vmatpush2.msra.mxu0 0.0
    %557 = vmatprep.subr.mxu0 0.0
    %558 = vmatpush2.msra.mxu0 0.0
    %559 = vmatprep.subr.mxu0 0.0
    %560 = vmatpush2.msra.mxu0 0.0
    %561 = vmatprep.subr.mxu0 0.0
    %562 = vmatpush2.msra.mxu0 0.0
    %563 = vmatprep.subr.mxu0 0.0
    %564 = vmatpush2.msra.mxu0 0.0
    %565 = vmatprep.subr.mxu0 0.0
    %566 = vmatpush2.msra.mxu0 0.0
    %567 = vmatprep.subr.mxu0 0.0
    %568 = vmatpush2.msra.mxu0 0.0
    %569 = vmatprep.subr.mxu0 0.0
    %570 = vmatpush2.msra.mxu0 0.0
    %571 = vmatprep.subr.mxu0 0.0
    %572 = vmatpush2.msra.mxu0 0.0
    %573 = vmatprep.subr.mxu0 0.0
    %574 = vmatpush2.msra.mxu0 0.0
    %575 = vmatprep.mubr.f32.mxu0 0.0
    %v576 = vand.u32 %v108, 4294901760
    %v577 = vsub.f32 %v108, %v576
    %v578 = vand.u32 %v577, 4294901760
    %579 = vmatmul.mubr.f32.gmra.mxu0 %v578
    %v580 = vpop.f32.mrf.mxu0
    %v581 = vadd.f32 %v485, %v580
    %v582 = vpop.f32.mrf.mxu0
    %583 = vmatprep.mubr.f32.mxu0 0.0
    %v584 = vand.u32 %v109, 4294901760
    %v585 = vsub.f32 %v109, %v584
    %v586 = vand.u32 %v585, 4294901760
    %587 = vmatmul.mubr.f32.gmra.mxu0 %v586
    %v588 = vpop.f32.mrf.mxu0
    %v589 = vadd.f32 %v492, %v588
    %v590 = vpop.f32.mrf.mxu0
    %591 = vdwg.mxu0
    %592 = vmatprep.subr.mxu0 0.0
    %v593 = vand.u32 %v125, 4294901760
    %v594 = vsub.f32 %v125, %v593
    %v595 = vand.u32 %v594, 4294901760
    %596 = vmatpush1.msra.mxu0 %v595
    %597 = vmatprep.subr.mxu0 0.0
    %v598 = vand.u32 %v124, 4294901760
    %v599 = vsub.f32 %v124, %v598
    %v600 = vand.u32 %v599, 4294901760
    %601 = vmatpush1.msra.mxu0 %v600
    %602 = vmatprep.subr.mxu0 0.0
    %v603 = vand.u32 %v123, 4294901760
    %v604 = vsub.f32 %v123, %v603
    %v605 = vand.u32 %v604, 4294901760
    %606 = vmatpush1.msra.mxu0 %v605
    %607 = vmatprep.subr.mxu0 0.0
    %v608 = vand.u32 %v122, 4294901760
    %v609 = vsub.f32 %v122, %v608
    %v610 = vand.u32 %v609, 4294901760
    %611 = vmatpush1.msra.mxu0 %v610
    %612 = vmatprep.subr.mxu0 0.0
    %v613 = vand.u32 %v121, 4294901760
    %v614 = vsub.f32 %v121, %v613
    %v615 = vand.u32 %v614, 4294901760
    %616 = vmatpush1.msra.mxu0 %v615
    %617 = vmatprep.subr.mxu0 0.0
    %v618 = vand.u32 %v120, 4294901760
    %v619 = vsub.f32 %v120, %v618
    %v620 = vand.u32 %v619, 4294901760
    %621 = vmatpush1.msra.mxu0 %v620
    %622 = vmatprep.subr.mxu0 0.0
    %v623 = vand.u32 %v119, 4294901760
    %v624 = vsub.f32 %v119, %v623
    %v625 = vand.u32 %v624, 4294901760
    %626 = vmatpush1.msra.mxu0 %v625
    %627 = vmatprep.subr.mxu0 0.0
    %v628 = vand.u32 %v118, 4294901760
    %v629 = vsub.f32 %v118, %v628
    %v630 = vand.u32 %v629, 4294901760
    %631 = vmatpush1.msra.mxu0 %v630
    %632 = vmatprep.subr.mxu0 0.0
    %v633 = vand.u32 %v117, 4294901760
    %v634 = vsub.f32 %v117, %v633
    %v635 = vand.u32 %v634, 4294901760
    %636 = vmatpush1.msra.mxu0 %v635
    %637 = vmatprep.subr.mxu0 0.0
    %v638 = vand.u32 %v116, 4294901760
    %v639 = vsub.f32 %v116, %v638
    %v640 = vand.u32 %v639, 4294901760
    %641 = vmatpush1.msra.mxu0 %v640
    %642 = vmatprep.subr.mxu0 0.0
    %v643 = vand.u32 %v115, 4294901760
    %v644 = vsub.f32 %v115, %v643
    %v645 = vand.u32 %v644, 4294901760
    %646 = vmatpush1.msra.mxu0 %v645
    %647 = vmatprep.subr.mxu0 0.0
    %v648 = vand.u32 %v114, 4294901760
    %v649 = vsub.f32 %v114, %v648
    %v650 = vand.u32 %v649, 4294901760
    %651 = vmatpush1.msra.mxu0 %v650
    %652 = vmatprep.subr.mxu0 0.0
    %v653 = vand.u32 %v113, 4294901760
    %v654 = vsub.f32 %v113, %v653
    %v655 = vand.u32 %v654, 4294901760
    %656 = vmatpush1.msra.mxu0 %v655
    %657 = vmatprep.subr.mxu0 0.0
    %v658 = vand.u32 %v112, 4294901760
    %v659 = vsub.f32 %v112, %v658
    %v660 = vand.u32 %v659, 4294901760
    %661 = vmatpush1.msra.mxu0 %v660
    %662 = vmatprep.subr.mxu0 0.0
    %v663 = vand.u32 %v111, 4294901760
    %v664 = vsub.f32 %v111, %v663
    %v665 = vand.u32 %v664, 4294901760
    %666 = vmatpush1.msra.mxu0 %v665
    %667 = vmatprep.subr.mxu0 0.0
    %v668 = vand.u32 %v110, 4294901760
    %v669 = vsub.f32 %v110, %v668
    %v670 = vand.u32 %v669, 4294901760
    %671 = vmatpush1.msra.mxu0 %v670
    %672 = vmatprep.subr.mxu0 0.0
    %673 = vmatpush2.msra.mxu0 0.0
    %674 = vmatprep.subr.mxu0 0.0
    %675 = vmatpush2.msra.mxu0 0.0
    %676 = vmatprep.subr.mxu0 0.0
    %677 = vmatpush2.msra.mxu0 0.0
    %678 = vmatprep.subr.mxu0 0.0
    %679 = vmatpush2.msra.mxu0 0.0
    %680 = vmatprep.subr.mxu0 0.0
    %681 = vmatpush2.msra.mxu0 0.0
    %682 = vmatprep.subr.mxu0 0.0
    %683 = vmatpush2.msra.mxu0 0.0
    %684 = vmatprep.subr.mxu0 0.0
    %685 = vmatpush2.msra.mxu0 0.0
    %686 = vmatprep.subr.mxu0 0.0
    %687 = vmatpush2.msra.mxu0 0.0
    %688 = vmatprep.subr.mxu0 0.0
    %689 = vmatpush2.msra.mxu0 0.0
    %690 = vmatprep.subr.mxu0 0.0
    %691 = vmatpush2.msra.mxu0 0.0
    %692 = vmatprep.subr.mxu0 0.0
    %693 = vmatpush2.msra.mxu0 0.0
    %694 = vmatprep.subr.mxu0 0.0
    %695 = vmatpush2.msra.mxu0 0.0
    %696 = vmatprep.subr.mxu0 0.0
    %697 = vmatpush2.msra.mxu0 0.0
    %698 = vmatprep.subr.mxu0 0.0
    %699 = vmatpush2.msra.mxu0 0.0
    %700 = vmatprep.subr.mxu0 0.0
    %701 = vmatpush2.msra.mxu0 0.0
    %702 = vmatprep.subr.mxu0 0.0
    %703 = vmatpush2.msra.mxu0 0.0
    %704 = vmatprep.mubr.f32.mxu0 0.0
    %v705 = vand.u32 %v108, 4294901760
    %706 = vmatmul.mubr.f32.gmra.mxu0 %v705
    %v707 = vpop.f32.mrf.mxu0
    %v708 = vadd.f32 %v581, %v707
    %v709 = vpop.f32.mrf.mxu0
    %710 = vmatprep.mubr.f32.mxu0 0.0
    %v711 = vand.u32 %v109, 4294901760
    %712 = vmatmul.mubr.f32.gmra.mxu0 %v711
    %v713 = vpop.f32.mrf.mxu0
    %v714 = vadd.f32 %v589, %v713
    %v715 = vpop.f32.mrf.mxu0
    %716 = vdwg.mxu0
    %717 = vmatprep.subr.mxu0 0.0
    %v718 = vand.u32 %v125, 4294901760
    %719 = vmatpush1.msra.mxu0 %v718
    %720 = vmatprep.subr.mxu0 0.0
    %v721 = vand.u32 %v124, 4294901760
    %722 = vmatpush1.msra.mxu0 %v721
    %723 = vmatprep.subr.mxu0 0.0
    %v724 = vand.u32 %v123, 4294901760
    %725 = vmatpush1.msra.mxu0 %v724
    %726 = vmatprep.subr.mxu0 0.0
    %v727 = vand.u32 %v122, 4294901760
    %728 = vmatpush1.msra.mxu0 %v727
    %729 = vmatprep.subr.mxu0 0.0
    %v730 = vand.u32 %v121, 4294901760
    %731 = vmatpush1.msra.mxu0 %v730
    %732 = vmatprep.subr.mxu0 0.0
    %v733 = vand.u32 %v120, 4294901760
    %734 = vmatpush1.msra.mxu0 %v733
    %735 = vmatprep.subr.mxu0 0.0
    %v736 = vand.u32 %v119, 4294901760
    %737 = vmatpush1.msra.mxu0 %v736
    %738 = vmatprep.subr.mxu0 0.0
    %v739 = vand.u32 %v118, 4294901760
    %740 = vmatpush1.msra.mxu0 %v739
    %741 = vmatprep.subr.mxu0 0.0
    %v742 = vand.u32 %v117, 4294901760
    %743 = vmatpush1.msra.mxu0 %v742
    %744 = vmatprep.subr.mxu0 0.0
    %v745 = vand.u32 %v116, 4294901760
    %746 = vmatpush1.msra.mxu0 %v745
    %747 = vmatprep.subr.mxu0 0.0
    %v748 = vand.u32 %v115, 4294901760
    %749 = vmatpush1.msra.mxu0 %v748
    %750 = vmatprep.subr.mxu0 0.0
    %v751 = vand.u32 %v114, 4294901760
    %752 = vmatpush1.msra.mxu0 %v751
    %753 = vmatprep.subr.mxu0 0.0
    %v754 = vand.u32 %v113, 4294901760
    %755 = vmatpush1.msra.mxu0 %v754
    %756 = vmatprep.subr.mxu0 0.0
    %v757 = vand.u32 %v112, 4294901760
    %758 = vmatpush1.msra.mxu0 %v757
    %759 = vmatprep.subr.mxu0 0.0
    %v760 = vand.u32 %v111, 4294901760
    %761 = vmatpush1.msra.mxu0 %v760
    %762 = vmatprep.subr.mxu0 0.0
    %v763 = vand.u32 %v110, 4294901760
    %764 = vmatpush1.msra.mxu0 %v763
    %765 = vmatprep.subr.mxu0 0.0
    %766 = vmatpush2.msra.mxu0 0.0
    %767 = vmatprep.subr.mxu0 0.0
    %768 = vmatpush2.msra.mxu0 0.0
    %769 = vmatprep.subr.mxu0 0.0
    %770 = vmatpush2.msra.mxu0 0.0
    %771 = vmatprep.subr.mxu0 0.0
    %772 = vmatpush2.msra.mxu0 0.0
    %773 = vmatprep.subr.mxu0 0.0
    %774 = vmatpush2.msra.mxu0 0.0
    %775 = vmatprep.subr.mxu0 0.0
    %776 = vmatpush2.msra.mxu0 0.0
    %777 = vmatprep.subr.mxu0 0.0
    %778 = vmatpush2.msra.mxu0 0.0
    %779 = vmatprep.subr.mxu0 0.0
    %780 = vmatpush2.msra.mxu0 0.0
    %781 = vmatprep.subr.mxu0 0.0
    %782 = vmatpush2.msra.mxu0 0.0
    %783 = vmatprep.subr.mxu0 0.0
    %784 = vmatpush2.msra.mxu0 0.0
    %785 = vmatprep.subr.mxu0 0.0
    %786 = vmatpush2.msra.mxu0 0.0
    %787 = vmatprep.subr.mxu0 0.0
    %788 = vmatpush2.msra.mxu0 0.0
    %789 = vmatprep.subr.mxu0 0.0
    %790 = vmatpush2.msra.mxu0 0.0
    %791 = vmatprep.subr.mxu0 0.0
    %792 = vmatpush2.msra.mxu0 0.0
    %793 = vmatprep.subr.mxu0 0.0
    %794 = vmatpush2.msra.mxu0 0.0
    %795 = vmatprep.subr.mxu0 0.0
    %796 = vmatpush2.msra.mxu0 0.0
    %797 = vmatprep.mubr.f32.mxu0 0.0
    %v798 = vand.u32 %v108, 4294901760
    %799 = vmatmul.mubr.f32.gmra.mxu0 %v798
    %v800 = vpop.f32.mrf.mxu0
    %v801 = vadd.f32 %v708, %v800
    %v802 = vpop.f32.mrf.mxu0
    %803 = vmatprep.mubr.f32.mxu0 0.0
    %v804 = vand.u32 %v109, 4294901760
    %805 = vmatmul.mubr.f32.gmra.mxu0 %v804
    %v806 = vpop.f32.mrf.mxu0
    %v807 = vadd.f32 %v714, %v806
    %v808 = vpop.f32.mrf.mxu0
    %809 = vdwg.mxu0
    %810 = vst [vmem:[#allocation3] sm:$0xff] %v801
    %811 = vst [vmem:[#allocation3 + $0x8] sm:$0xff] %v807
    %814 = vrot.lane.b32.xlu0 %v801, 96
    %v815 = vpop.permute.xlu0 %814
    %816 = vrot.lane.b32.xlu0 %v807, 96
    %v817 = vpop.permute.xlu0 %816
    %v820 = vmul.f32 %v801, %v815
    %v821 = vmul.f32 %v807, %v817
    %824 = vrot.lane.b32.xlu0 %v820, 64
    %v825 = vpop.permute.xlu0 %824
    %826 = vrot.lane.b32.xlu0 %v821, 64
    %v827 = vpop.permute.xlu0 %826
    %vm830 = vcmask 785920
    %831 = vst.msk [vmem:[#allocation3] sm:$0xff] %vm830, %v825
    %832 = vst.msk [vmem:[#allocation3 + $0x8] sm:$0xff] %vm830, %v827
    // Predicated region
    $region14: #{endpoint_span_extractor_padded.1} parent=1 // pred_check
      _
    $region15: #{endpoint_span_extractor_padded.1} parent=1 // pred_check_branch
      %834 = sbr.rel (0) target = $region17
    $region16: #{endpoint_span_extractor_padded.1} parent=1 // pred_region
      %s836 = ssub.s32 256, 256
      %837 = vsyncadd [#allocation4], %s836
      %s838 = sshll.u32 [#allocation3], 4
      %s839 = int_to_ptr.vmem [resolvable:$true] %s838
      %844 = dma.vmem_to_hbm [thread:$0]  %s839, 256, %s3, [#allocation4], 128, 128, 8
    $region17: #{endpoint_span_extractor_padded.1} parent=1 // pred_fallthru
      _
    // Predicated region
    $region18: #{endpoint_span_extractor_padded.1} parent=1 // pred_check
      _
    $region19: #{endpoint_span_extractor_padded.1} parent=1 // pred_check_branch
      %846 = sbr.rel (0) target = $region21
    $region20: #{endpoint_span_extractor_padded.1} parent=1 // pred_region
      %847 = dma.done [#allocation4], 256
    $region21: #{endpoint_span_extractor_padded.1} parent=1 // pred_fallthru
      _
    %848 = vsyncpa [#allocation4], 1

</llo_original>
